<compile_context>
chip_gen: v7x
topology: tpu7x:2x2x1
jax: 0.10.0
libtpu: 0.0.40
codegen_flags: <defaults>
</compile_context>

<pallas_src>
import functools

import jax
import jax.numpy as jnp
from jax.experimental import pallas as pl
from jax.experimental.pallas import tpu as pltpu


_MAX_TM = 512        # sublane tile cap
_MAX_TK = 4096       # single-step reduction cap (lane dim of x)
_MAX_TN = 512        # lane tile cap for the output / weights
_TK_SPLIT = 2048     # k-tile when K_pad > _MAX_TK


def _round_up(v, m):
    return (v + m - 1) // m * m


def _pad_dims(K, N):
    """Padded K/N — depends ONLY on the Linear layer shape (not on batch)."""
    K128 = _round_up(K, 128)
    K_pad = K128 if K128 <= _MAX_TK else _round_up(K, _TK_SPLIT)
    N128 = _round_up(N, 128)
    N_pad = N128 if N128 <= _MAX_TN else _round_up(N, _MAX_TN)
    return K_pad, N_pad


def _tile_plan(M, K_pad, N_pad):
    """Tile sizes + padded M.  All lane dims are 128-multiples, sublane 8-multiples."""
    # M: pick the tile that minimizes padding under the cap.
    m_tiles = -(-M // _MAX_TM)
    TM = _round_up(-(-M // m_tiles), 8)
    M_pad = m_tiles * TM
    # K: collapsed when it fits; otherwise split into 2048-wide steps.
    TK = K_pad if K_pad <= _MAX_TK else _TK_SPLIT
    # N: collapse j when small, but keep >= 2 parallel blocks for v7x's 2 TCs
    # when the grid would otherwise be a single block.
    if N_pad > _MAX_TN:
        TN = _MAX_TN
    elif m_tiles == 1 and N_pad >= 256 and (N_pad // 128) % 2 == 0:
        TN = N_pad // 2
    else:
        TN = N_pad
    return TM, TK, TN, M_pad


def _vmem_limit_bytes(TM, TK, TN, x_itemsize, w_itemsize, out_itemsize, needs_acc):
    # Double-buffered input/output tiles + bias + (optional) f32 accumulator.
    buf = 2 * (TM * TK * x_itemsize + TK * TN * w_itemsize
               + TM * TN * out_itemsize + TN * 4)
    if needs_acc:
        buf += TM * TN * 4
    return int(min(max(buf + (4 << 20), 32 << 20), 48 << 20))


def _fused_kernel(x_ref, w_ref, b_ref, o_ref):
    # Single K step: dot -> bias add (f32, v5e-safe) -> cast, no scratch.
    acc = jnp.dot(x_ref[...].astype(w_ref.dtype), w_ref[...],
                  preferred_element_type=jnp.float32)
    o_ref[...] = (acc + b_ref[...]).astype(o_ref.dtype)


def _reduce_kernel(x_ref, w_ref, b_ref, o_ref, acc_ref):
    # Fallback for very large K: K innermost, f32 VMEM accumulator.
    k = pl.program_id(2)

    @pl.when(k == 0)
    def _():
        acc_ref[...] = jnp.zeros_like(acc_ref)

    acc_ref[...] += jnp.dot(x_ref[...].astype(w_ref.dtype), w_ref[...],
                            preferred_element_type=jnp.float32)

    @pl.when(k == pl.num_programs(2) - 1)
    def _():
        o_ref[...] = (acc_ref[...] + b_ref[...]).astype(o_ref.dtype)


def prepare_flatten_head_params(weight, bias, compute_dtype=jnp.bfloat16):
    """One-time (parameter-load time) transpose + pad + cast of the Linear params.

    weight: [target_window, head_dim], bias: [target_window].
    Returns (w_prepared [K_pad, N_pad] compute_dtype, b_prepared [1, N_pad] f32).
    Zero-padding of the K tail keeps the padded reduction exact.
    """
    N, K = weight.shape
    K_pad, N_pad = _pad_dims(K, N)
    w_t = jnp.transpose(weight).astype(compute_dtype)            # [K, N], done once
    w_p = jnp.pad(w_t, ((0, K_pad - K), (0, N_pad - N)))
    b_p = jnp.pad(bias.astype(jnp.float32), (0, N_pad - N)).reshape(1, N_pad)
    return w_p, b_p


def flatten_head_forward(x, w_prepared, b_prepared, head_dim, target_window,
                         out_dtype=None):
    """x: [B, n_vars, d_model, nf]; w_prepared: [K_pad, N_pad]; b_prepared: [1, N_pad]."""
    B, n_vars, d_model, nf = x.shape
    assert d_model * nf == head_dim
    M, K, N = B * n_vars, head_dim, target_window
    out_dtype = x.dtype if out_dtype is None else out_dtype

    K_pad, N_pad = _pad_dims(K, N)
    assert w_prepared.shape == (K_pad, N_pad), (w_prepared.shape, (K_pad, N_pad))
    assert b_prepared.shape == (1, N_pad)

    TM, TK, TN, M_pad = _tile_plan(M, K_pad, N_pad)
    i_steps, j_steps, k_steps = M_pad // TM, N_pad // TN, K_pad // TK

    # Row-major flatten of last two dims == torch Flatten(start_dim=-2); merge batch
    # dims.  Pad ONLY if needed; x stays in its native dtype (cast happens in-kernel).
    x_flat = x.reshape(M, K)
    if (M_pad, K_pad) != (M, K):
        x_flat = jnp.pad(x_flat, ((0, M_pad - M), (0, K_pad - K)))

    x_itemsize = jnp.dtype(x.dtype).itemsize
    w_itemsize = jnp.dtype(w_prepared.dtype).itemsize
    out_itemsize = jnp.dtype(out_dtype).itemsize

    cost = pl.CostEstimate(
        flops=2 * M * K * N,
        transcendentals=0,
        bytes_accessed=int(M_pad * K_pad * x_itemsize
                           + (K_pad * N_pad * w_itemsize) * i_steps
                           + M_pad * N_pad * out_itemsize),
    )

    if k_steps == 1:
        grid = (i_steps, j_steps)
        kernel = _fused_kernel
        in_specs = [
            pl.BlockSpec((TM, TK), lambda i, j: (i, 0)),
            pl.BlockSpec((TK, TN), lambda i, j: (0, j)),
            pl.BlockSpec((1, TN), lambda i, j: (0, j)),
        ]
        out_specs = pl.BlockSpec((TM, TN), lambda i, j: (i, j))
        scratch_shapes = []
        dim_sem = ("parallel", "parallel")
    else:
        grid = (i_steps, j_steps, k_steps)
        kernel = _reduce_kernel
        in_specs = [
            pl.BlockSpec((TM, TK), lambda i, j, k: (i, k)),
            pl.BlockSpec((TK, TN), lambda i, j, k: (k, j)),
            pl.BlockSpec((1, TN), lambda i, j, k: (0, j)),
        ]
        out_specs = pl.BlockSpec((TM, TN), lambda i, j, k: (i, j))
        scratch_shapes = [pltpu.VMEM((TM, TN), jnp.float32)]
        dim_sem = ("parallel", "parallel", "arbitrary")

    out = pl.pallas_call(
        kernel,
        out_shape=jax.ShapeDtypeStruct((M_pad, N_pad), out_dtype),
        grid_spec=pltpu.PrefetchScalarGridSpec(
            num_scalar_prefetch=0,
            grid=grid,
            in_specs=in_specs,
            out_specs=out_specs,
            scratch_shapes=scratch_shapes,
        ),
        compiler_params=pltpu.CompilerParams(
            dimension_semantics=dim_sem,
            vmem_limit_bytes=_vmem_limit_bytes(
                TM, TK, TN, x_itemsize, w_itemsize, out_itemsize,
                needs_acc=(k_steps > 1)),
        ),
        cost_estimate=cost,
    )(x_flat, w_prepared, b_prepared)

    # Slice only if padding was actually added (no-op copy avoided otherwise).
    if (M_pad, N_pad) != (M, N):
        out = out[:M, :N]
    # TODO(synk): dropout omitted (head_dropout=0 / inference); a training path would
    # apply a pltpu.prng_random_bits mask in the kernel epilogue.
    return out.reshape(B, n_vars, N)


if __name__ == "__main__":
    # Small, module-consistent shapes: head_dim = d_model * nf.
    B, n_vars, d_model, nf, target_window = 2, 4, 32, 4, 16
    head_dim = d_model * nf

    key = jax.random.PRNGKey(0)
    kx, kw, kb = jax.random.split(key, 3)

    x = jax.random.normal(kx, (B, n_vars, d_model, nf), dtype=jnp.float32)
    # nn.Linear(head_dim, target_window) parameters.
    weight = jax.random.normal(kw, (target_window, head_dim), dtype=jnp.float32) * 0.02
    bias = jax.random.normal(kb, (target_window,), dtype=jnp.float32) * 0.02

    # Parameter prep happens once ("load time"), not per forward call.
    w_prep, b_prep = prepare_flatten_head_params(weight, bias)

    fwd = jax.jit(functools.partial(flatten_head_forward,
                                    head_dim=head_dim,
                                    target_window=target_window))
    y = fwd(x, w_prep, b_prep)
    jax.block_until_ready(y)

    # Reference check in plain JAX (same math path as the PyTorch module).
    y_ref = x.reshape(B, n_vars, head_dim) @ weight.T + bias
    assert y.shape == (B, n_vars, target_window)
    # bf16 operands with f32 accumulation -> loose tolerance.
    assert jnp.allclose(y, y_ref, atol=1e-2, rtol=1e-2), float(jnp.abs(y - y_ref).max())

    print("KERNEL_OK")
</pallas_src>

<mosaic_0001>
module attributes {stable_mosaic.version = 11 : i64} {
  func.func @_fused_kernel(%arg0: i32, %arg1: i32, %arg2: memref<8x128xf32, #tpu.memory_space<vmem>>, %arg3: memref<128x128xbf16, #tpu.memory_space<vmem>>, %arg4: memref<1x128xf32, #tpu.memory_space<vmem>>, %arg5: memref<8x128xf32, #tpu.memory_space<vmem>>) attributes {dimension_semantics = [#tpu.dimension_semantics<parallel>, #tpu.dimension_semantics<parallel>], iteration_bounds = array<i64: 1, 1>, scalar_prefetch = 0 : i64, scratch_operands = 0 : i64, tpu.core_type = #tpu.core_type<tc>, window_params = [{transform_indices = @transform_0, window_bounds = array<i64: 8, 128>}, {transform_indices = @transform_1, window_bounds = array<i64: 128, 128>}, {transform_indices = @transform_2, window_bounds = array<i64: 1, 128>}, {transform_indices = @transform_3, window_bounds = array<i64: 8, 128>}]} {
    %c0 = arith.constant 0 : index
    %c0_0 = arith.constant 0 : index
    %0 = vector.load %arg2[%c0, %c0_0] : memref<8x128xf32, #tpu.memory_space<vmem>>, vector<8x128xf32>
    %1 = arith.truncf %0 : vector<8x128xf32> to vector<8x128xbf16>
    %c0_1 = arith.constant 0 : index
    %c0_2 = arith.constant 0 : index
    %2 = vector.load %arg3[%c0_1, %c0_2] : memref<128x128xbf16, #tpu.memory_space<vmem>>, vector<128x128xbf16>
    %cst = arith.constant dense<0.000000e+00> : vector<8x128xf32>
    %3 = tpu.matmul %1, %2, %cst {dimension_numbers = #tpu.dot_dimension_numbers<[1], [0], [0], [1], [0, 0, 1, 1], [], []>} : vector<8x128xbf16>, vector<128x128xbf16>, vector<8x128xf32> -> vector<8x128xf32>
    %c0_3 = arith.constant 0 : index
    %c0_4 = arith.constant 0 : index
    %4 = vector.load %arg4[%c0_3, %c0_4] : memref<1x128xf32, #tpu.memory_space<vmem>>, vector<1x128xf32>
    %5 = vector.broadcast %4 : vector<1x128xf32> to vector<8x128xf32>
    %6 = arith.addf %3, %5 : vector<8x128xf32>
    %c0_5 = arith.constant 0 : index
    %c0_6 = arith.constant 0 : index
    %7 = vector.load %arg5[%c0_5, %c0_6] : memref<8x128xf32, #tpu.memory_space<vmem>>, vector<8x128xf32>
    tpu.vector_store %arg5[%c0_5, %c0_6], %6 {strides = array<i32>} : memref<8x128xf32, #tpu.memory_space<vmem>>, vector<8x128xf32>,
    return
  }
  func.func @transform_0(%arg0: i32, %arg1: i32) -> (i32, i32) {
    %c0_i32 = arith.constant 0 : i32
    %c0_i32_0 = arith.constant 0 : i32
    return %arg0, %c0_i32 : i32, i32
  }
  func.func @transform_1(%arg0: i32, %arg1: i32) -> (i32, i32) {
    %c0_i32 = arith.constant 0 : i32
    %c0_i32_0 = arith.constant 0 : i32
    return %c0_i32, %arg1 : i32, i32
  }
  func.func @transform_2(%arg0: i32, %arg1: i32) -> (i32, i32) {
    %c0_i32 = arith.constant 0 : i32
    %c0_i32_0 = arith.constant 0 : i32
    return %c0_i32, %arg1 : i32, i32
  }
  func.func @transform_3(%arg0: i32, %arg1: i32) -> (i32, i32) {
    %c0_i32 = arith.constant 0 : i32
    return %arg0, %arg1 : i32, i32
  }
}

</mosaic_0001>

<llo_original>
// kernel: flatten_head_forward.1
$region0: #{flatten_head_forward.1}
  #allocation0 [shape = 'u32[]', space=smem, size = 0x4, offset = 0x4, fixed_abs, tag = 'smem constant byte address 0x4 - core index']
  #allocation1 [shape = 'u32[144,128]{1,0:T(1,128)}', space=vmem, size = 0x12000, scoped, tag = 'internal scratch']
  %s0 = inlined_call_operand.vmem [shape: f32[8,128], index: 0, kind: input, shape index: {}]
  %s1 = inlined_call_operand.vmem [shape: bf16[128,128], index: 1, kind: input, shape index: {}]
  %s2 = inlined_call_operand.vmem [shape: f32[1,128], index: 2, kind: input, shape index: {}]
  %s3 = inlined_call_operand.hbm [shape: f32[8,128], index: 3, kind: output, shape index: {}]
  %s4 = sld [smem:[#allocation0]]
  $region22: #{flatten_head_forward.1} parent=0
    _
  %s6 = ssub.s32 1, %s4
  %s7 = scalar_select 0, %s6, %s4
  $region1: #{flatten_head_forward.1} parent=0
    #allocation2 [shape = 'u8[4096]{0}', space=vmem, size = 0x1000, scoped, tag = 'output window, operand 0, single buffered']
    #allocation3 [shape = 's32[1]{0}', space=sflag, size = 0x4, scoped, tag = 'scoped memory for flatten_head_forward.1']
    %8 = vsyncpa [#allocation3], 0
    // Predicated region
    $region2: #{flatten_head_forward.1} parent=1 // pred_check
      _
    $region3: #{flatten_head_forward.1} parent=1 // pred_check_branch
      %10 = sbr.rel (0) target = $region5
    $region4: #{flatten_head_forward.1} parent=1 // pred_region
      _
    $region5: #{flatten_head_forward.1} parent=1 // pred_fallthru
      _
    // Predicated region
    $region6: #{flatten_head_forward.1} parent=1 // pred_check
      _
    $region7: #{flatten_head_forward.1} parent=1 // pred_check_branch
      %12 = sbr.rel (0) target = $region9
    $region8: #{flatten_head_forward.1} parent=1 // pred_region
      _
    $region9: #{flatten_head_forward.1} parent=1 // pred_fallthru
      _
    // Predicated region
    $region10: #{flatten_head_forward.1} parent=1 // pred_check
      _
    $region11: #{flatten_head_forward.1} parent=1 // pred_check_branch
      %14 = sbr.rel (0) target = $region13
    $region12: #{flatten_head_forward.1} parent=1 // pred_region
      _
    $region13: #{flatten_head_forward.1} parent=1 // pred_fallthru
      _
    %v16 = vld [vmem:[%s0] sm:$0xff]
    %v17 = vpack.c.bf16 %v16, %v16
    %v18 = vld [vmem:[%s1] sm:$0xf]
    %v19 = vld [vmem:[%s1 + $0x4] sm:$0xf]
    %v20 = vld [vmem:[%s1 + $0x8] sm:$0xf]
    %v21 = vld [vmem:[%s1 + $0xc] sm:$0xf]
    %v22 = vld [vmem:[%s1 + $0x10] sm:$0xf]
    %v23 = vld [vmem:[%s1 + $0x14] sm:$0xf]
    %v24 = vld [vmem:[%s1 + $0x18] sm:$0xf]
    %v25 = vld [vmem:[%s1 + $0x1c] sm:$0xf]
    %v26 = vld [vmem:[%s1 + $0x20] sm:$0xf]
    %v27 = vld [vmem:[%s1 + $0x24] sm:$0xf]
    %v28 = vld [vmem:[%s1 + $0x28] sm:$0xf]
    %v29 = vld [vmem:[%s1 + $0x2c] sm:$0xf]
    %v30 = vld [vmem:[%s1 + $0x30] sm:$0xf]
    %v31 = vld [vmem:[%s1 + $0x34] sm:$0xf]
    %v32 = vld [vmem:[%s1 + $0x38] sm:$0xf]
    %v33 = vld [vmem:[%s1 + $0x3c] sm:$0xf]
    %v34 = vld [vmem:[%s2] sm:$0x1]
    %v36 = vlaneseq
    %v37 = vshrl.u32 %v36, 7
    %v38 = vsub.s32 0, %v37
    %v39 = vrot.slane %v34, %v38
    %v57 = vunpack.c.l.b16 %v18
    %v58 = vunpack.c.l.b16 %v19
    %v59 = vunpack.c.l.b16 %v20
    %v60 = vunpack.c.l.b16 %v21
    %v61 = vunpack.c.l.b16 %v22
    %v62 = vunpack.c.l.b16 %v23
    %v63 = vunpack.c.l.b16 %v24
    %v64 = vunpack.c.l.b16 %v25
    %v65 = vunpack.c.l.b16 %v26
    %v66 = vunpack.c.l.b16 %v27
    %v67 = vunpack.c.l.b16 %v28
    %v68 = vunpack.c.l.b16 %v29
    %v69 = vunpack.c.l.b16 %v30
    %v70 = vunpack.c.l.b16 %v31
    %v71 = vunpack.c.l.b16 %v32
    %v72 = vunpack.c.l.b16 %v33
    %v73 = vpack.c.b16 %v58, %v57
    %v74 = vpack.c.b16 %v60, %v59
    %v75 = vpack.c.b16 %v62, %v61
    %v76 = vpack.c.b16 %v64, %v63
    %v77 = vpack.c.b16 %v66, %v65
    %v78 = vpack.c.b16 %v68, %v67
    %v79 = vpack.c.b16 %v70, %v69
    %v80 = vpack.c.b16 %v72, %v71
    %89 = vmatprep.subr.bf16.mxu0 0
    %90 = vmatpush1.bf16.msra.mxu0 %v73
    %91 = vmatprep.subr.bf16.mxu0 0
    %92 = vmatpush1.bf16.msra.mxu0 %v74
    %93 = vmatprep.subr.bf16.mxu0 0
    %94 = vmatpush1.bf16.msra.mxu0 %v75
    %95 = vmatprep.subr.bf16.mxu0 0
    %96 = vmatpush1.bf16.msra.mxu0 %v76
    %97 = vmatprep.subr.bf16.mxu0 0
    %98 = vmatpush1.bf16.msra.mxu0 %v77
    %99 = vmatprep.subr.bf16.mxu0 0
    %100 = vmatpush1.bf16.msra.mxu0 %v78
    %101 = vmatprep.subr.bf16.mxu0 0
    %102 = vmatpush1.bf16.msra.mxu0 %v79
    %103 = vmatprep.subr.bf16.mxu0 0
    %104 = vmatpush1.bf16.msra.mxu0 %v80
    %105 = vmatprep.subr.bf16.mxu0 0
    %106 = vmatpush1.bf16.msra.mxu0 0
    %107 = vmatprep.subr.bf16.mxu0 0
    %108 = vmatpush1.bf16.msra.mxu0 0
    %109 = vmatprep.subr.bf16.mxu0 0
    %110 = vmatpush1.bf16.msra.mxu0 0
    %111 = vmatprep.subr.bf16.mxu0 0
    %112 = vmatpush1.bf16.msra.mxu0 0
    %113 = vmatprep.subr.bf16.mxu0 0
    %114 = vmatpush1.bf16.msra.mxu0 0
    %115 = vmatprep.subr.bf16.mxu0 0
    %116 = vmatpush1.bf16.msra.mxu0 0
    %117 = vmatprep.subr.bf16.mxu0 0
    %118 = vmatpush1.bf16.msra.mxu0 0
    %119 = vmatprep.subr.bf16.mxu0 0
    %120 = vmatpush1.bf16.msra.mxu0 0
    %121 = vmatprep.mubr.bf16.mxu0 0
    %122 = vmatmul.mubr.bf16.gmra.mrb[0].mxu0 %v17
    %v123 = vpop.f32.mrb[0].mxu0
    %v124 = vadd.f32 %v39, %v123
    %v125 = vpop.f32.mrb[0].mxu0
    %v126 = vpop.f32.mrb[0].mxu0
    %v127 = vpop.f32.mrb[0].mxu0
    %128 = vdwg.mxu0
    %129 = vst [vmem:[#allocation2] sm:$0xff] %v124
    // Predicated region
    $region14: #{flatten_head_forward.1} parent=1 // pred_check
      _
    $region15: #{flatten_head_forward.1} parent=1 // pred_check_branch
      %131 = sbr.rel (0) target = $region17
    $region16: #{flatten_head_forward.1} parent=1 // pred_region
      %s133 = ssub.s32 128, 128
      %134 = vsyncadd [#allocation3], %s133
      %s136 = sshll.u32 [#allocation2], 4
      %s137 = int_to_ptr.vmem [resolvable:$true] %s136
      %139 = dma.vmem_to_hbm [thread:$0]  %s137, 128, %s3, [#allocation3]
    $region17: #{flatten_head_forward.1} parent=1 // pred_fallthru
      _
    // Predicated region
    $region18: #{flatten_head_forward.1} parent=1 // pred_check
      _
    $region19: #{flatten_head_forward.1} parent=1 // pred_check_branch
      %141 = sbr.rel (0) target = $region21
    $region20: #{flatten_head_forward.1} parent=1 // pred_region
      %142 = dma.done [#allocation3], 128
    $region21: #{flatten_head_forward.1} parent=1 // pred_fallthru
      _
    %143 = vsyncpa [#allocation3], 1

</llo_original>
